<compile_context>
chip_gen: v7x
topology: tpu7x:2x2x1
jax: 0.10.0
libtpu: 0.0.40
codegen_flags: <defaults>
</compile_context>

<pallas_src>
import math

import jax
import jax.numpy as jnp
from jax.experimental import pallas as pl
from jax.experimental.pallas import tpu as pltpu


def _round_up(x, m):
    return ((x + m - 1) // m) * m


def _mapreduce_kernel(x_ref, w_ref, b_ref, o_ref):
    # x_ref: (1, C_pad, TILE_S)  input tile, channels on sublanes, spatial on lanes
    # w_ref: (C_pad, 1)          1x1-conv weight (zero-padded channels)
    # b_ref: (1, 1)              scalar bias in SMEM
    # o_ref: (1, 1, TILE_S)      lane-dense output tile
    x = x_ref[0]                         # (C_pad, TILE_S)
    w = w_ref[...]                       # (C_pad, 1) -> lane-broadcast
    acc = jnp.sum(x * w, axis=0, keepdims=True)   # VPU mul + sublane reduce
    o_ref[0] = (acc + b_ref[0, 0]).astype(o_ref.dtype)


def mapreduce(x_nchw, weight, bias, *, target_block_bytes=2 << 20):
    """1x1 conv (channels -> 1) with bias, matching nn.Conv2d(C, 1, 1).

    x_nchw: (N, C, H, W) float32
    weight: (1, C, 1, 1) float32  (PyTorch conv weight layout)
    bias:   (1,)         float32
    returns (N, 1, H, W) float32
    """
    N, C, H, W = x_nchw.shape
    S = H * W
    LANE = 128
    C_pad = _round_up(C, 8)                         # channels on sublanes

    # Spatial (lane) tile: as big as possible up to ~target_block_bytes,
    # but never bigger than the (lane-rounded) spatial extent itself.
    s_round = _round_up(S, LANE)
    max_tile = max(LANE, (target_block_bytes // (C_pad * 4)) // LANE * LANE)
    tile_s = min(s_round, max_tile)
    S_pad = _round_up(S, tile_s)

    # Free reshape of NCHW; zero-pad C and S (padded weights are zero, so the
    # padded channels contribute nothing; padded spatial columns are sliced off).
    x3 = x_nchw.reshape(N, C, S)
    x3 = jnp.pad(x3, ((0, 0), (0, C_pad - C), (0, S_pad - S)))

    w = jnp.pad(weight.reshape(C), (0, C_pad - C)).reshape(C_pad, 1)
    b = bias.reshape(1, 1)

    grid = (N, S_pad // tile_s)

    # Explicit VMEM budget: double-buffered input + output blocks + weight,
    # with headroom; cap at 32 MiB so it is safe on v5e/v6e/v7x alike.
    x_block_bytes = C_pad * tile_s * 4
    o_block_bytes = tile_s * 4
    need = 2 * x_block_bytes + 2 * o_block_bytes + C_pad * 4 + (1 << 20)
    vmem_limit = int(min(max(need, 4 << 20), 32 << 20))

    out = pl.pallas_call(
        _mapreduce_kernel,
        out_shape=jax.ShapeDtypeStruct((N, 1, S_pad), jnp.float32),
        grid_spec=pltpu.PrefetchScalarGridSpec(
            num_scalar_prefetch=0,
            grid=grid,
            in_specs=[
                pl.BlockSpec((1, C_pad, tile_s), lambda n, s: (n, 0, s)),   # x tile
                pl.BlockSpec((C_pad, 1), lambda n, s: (0, 0)),              # weight
                pl.BlockSpec((1, 1), lambda n, s: (0, 0),
                             memory_space=pltpu.MemorySpace.SMEM),          # bias
            ],
            out_specs=pl.BlockSpec((1, 1, tile_s), lambda n, s: (n, 0, s)),
        ),
        compiler_params=pltpu.CompilerParams(
            dimension_semantics=("parallel", "parallel"),
            vmem_limit_bytes=vmem_limit),
    )(x3, w, b)

    # (N, 1, S_pad) -> drop spatial padding -> (N, 1, H, W)  (free reshape)
    return out[:, :, :S].reshape(N, 1, H, W)


def init_params(channels, key):
    """Deterministic init mirroring nn.Conv2d defaults (bias from same uniform)."""
    fan_in = channels * 1 * 1
    bound = 1.0 / math.sqrt(fan_in)
    k_w, k_b = jax.random.split(key)
    weight = jax.random.uniform(
        k_w, (1, channels, 1, 1), minval=-bound, maxval=bound, dtype=jnp.float32)
    bias = jax.random.uniform(
        k_b, (1,), minval=-bound, maxval=bound, dtype=jnp.float32)
    return weight, bias


def _reference(x, weight, bias):
    N, C, H, W = x.shape
    return (jnp.einsum("nchw,oc->nohw", x, weight.reshape(1, C))
            + bias.reshape(1, 1, 1, 1))


if __name__ == "__main__":
    key = jax.random.PRNGKey(0)
    k1, k2, k3, k4 = jax.random.split(key, 4)

    # Case 1: small shape consistent with the module's classifier inputs.
    N, C, H, W = 2, 4, 16, 16
    x = jax.random.normal(k1, (N, C, H, W), dtype=jnp.float32)
    weight, bias = init_params(C, k2)
    out = jax.block_until_ready(mapreduce(x, weight, bias))
    ref = _reference(x, weight, bias)
    assert out.shape == (N, 1, H, W)
    assert jnp.allclose(out, ref, atol=1e-5, rtol=1e-5)

    # Case 2: ragged spatial size + C=3 (the final `classifier` conv),
    # exercising the channel/spatial padding path.
    N2, C2, H2, W2 = 1, 3, 19, 13
    x2 = jax.random.normal(k3, (N2, C2, H2, W2), dtype=jnp.float32)
    weight2, bias2 = init_params(C2, k4)
    out2 = jax.block_until_ready(mapreduce(x2, weight2, bias2))
    ref2 = _reference(x2, weight2, bias2)
    assert out2.shape == (N2, 1, H2, W2)
    assert jnp.allclose(out2, ref2, atol=1e-5, rtol=1e-5)

    print("KERNEL_OK")
</pallas_src>

<mosaic_0001>
module attributes {stable_mosaic.version = 11 : i64} {
  func.func @_mapreduce_kernel(%arg0: i32, %arg1: i32, %arg2: memref<1x8x256xf32, #tpu.memory_space<vmem>>, %arg3: memref<8x1xf32, #tpu.memory_space<vmem>>, %arg4: memref<1x1xf32, #tpu.memory_space<smem>>, %arg5: memref<1x1x256xf32, #tpu.memory_space<vmem>>) attributes {dimension_semantics = [#tpu.dimension_semantics<parallel>, #tpu.dimension_semantics<parallel>], iteration_bounds = array<i64: 2, 1>, scalar_prefetch = 0 : i64, scratch_operands = 0 : i64, tpu.core_type = #tpu.core_type<tc>, window_params = [{transform_indices = @transform_0, window_bounds = array<i64: 1, 8, 256>}, {pipeline_mode = #tpu.pipeline_mode<synchronous>, transform_indices = @transform_1, window_bounds = array<i64: 8, 1>}, {transform_indices = @transform_2, window_bounds = array<i64: 1, 1>}, {transform_indices = @transform_3, window_bounds = array<i64: 1, 1, 256>}]} {
    %c0 = arith.constant 0 : index
    %c0_0 = arith.constant 0 : index
    %c0_1 = arith.constant 0 : index
    %0 = vector.load %arg2[%c0, %c0_0, %c0_1] : memref<1x8x256xf32, #tpu.memory_space<vmem>>, vector<1x8x256xf32>
    %1 = vector.shape_cast %0 : vector<1x8x256xf32> to vector<8x256xf32>
    %c0_2 = arith.constant 0 : index
    %c0_3 = arith.constant 0 : index
    %2 = vector.load %arg3[%c0_2, %c0_3] : memref<8x1xf32, #tpu.memory_space<vmem>>, vector<8x1xf32>
    %3 = vector.broadcast %2 : vector<8x1xf32> to vector<8x256xf32>
    %4 = arith.mulf %1, %3 : vector<8x256xf32>
    %cst = arith.constant dense<0.000000e+00> : vector<256xf32>
    %5 = vector.multi_reduction <add>, %4, %cst [0] : vector<8x256xf32> to vector<256xf32>
    %6 = vector.shape_cast %5 : vector<256xf32> to vector<1x256xf32>
    %c0_4 = arith.constant 0 : index
    %c0_5 = arith.constant 0 : index
    %7 = memref.load %arg4[%c0_4, %c0_5] : memref<1x1xf32, #tpu.memory_space<smem>>
    %8 = vector.broadcast %7 : f32 to vector<1x256xf32>
    %9 = arith.addf %6, %8 : vector<1x256xf32>
    %c0_6 = arith.constant 0 : index
    %c0_7 = arith.constant 0 : index
    %c0_8 = arith.constant 0 : index
    %10 = vector.load %arg5[%c0_6, %c0_7, %c0_8] : memref<1x1x256xf32, #tpu.memory_space<vmem>>, vector<1x1x256xf32>
    %11 = vector.shape_cast %10 : vector<1x1x256xf32> to vector<1x256xf32>
    %12 = vector.shape_cast %9 : vector<1x256xf32> to vector<1x1x256xf32>
    tpu.vector_store %arg5[%c0_6, %c0_7, %c0_8], %12 {strides = array<i32>} : memref<1x1x256xf32, #tpu.memory_space<vmem>>, vector<1x1x256xf32>,
    return
  }
  func.func @transform_0(%arg0: i32, %arg1: i32) -> (i32, i32, i32) {
    %c0_i32 = arith.constant 0 : i32
    %c0_i32_0 = arith.constant 0 : i32
    return %arg0, %c0_i32, %arg1 : i32, i32, i32
  }
  func.func @transform_1(%arg0: i32, %arg1: i32) -> (i32, i32) {
    %c0_i32 = arith.constant 0 : i32
    %c0_i32_0 = arith.constant 0 : i32
    %c0_i32_1 = arith.constant 0 : i32
    return %c0_i32, %c0_i32_0 : i32, i32
  }
  func.func @transform_2(%arg0: i32, %arg1: i32) -> (i32, i32) {
    %c0_i32 = arith.constant 0 : i32
    %c0_i32_0 = arith.constant 0 : i32
    %c0_i32_1 = arith.constant 0 : i32
    return %c0_i32, %c0_i32_0 : i32, i32
  }
  func.func @transform_3(%arg0: i32, %arg1: i32) -> (i32, i32, i32) {
    %c0_i32 = arith.constant 0 : i32
    %c0_i32_0 = arith.constant 0 : i32
    return %arg0, %c0_i32, %arg1 : i32, i32, i32
  }
}

</mosaic_0001>

<llo_original>
// kernel: tpu_custom_call.1
$region0: #{tpu_custom_call.1}
  #allocation0 [shape = 'u32[]', space=smem, size = 0x4, offset = 0x4, fixed_abs, tag = 'smem constant byte address 0x4 - core index']
  #allocation1 [shape = 'u32[144,128]{1,0:T(1,128)}', space=vmem, size = 0x12000, scoped, tag = 'internal scratch']
  #allocation2 [shape = 'f32[1,1]{1,0:T(1,128)S(6)}', space=smem, size = 0x200, scoped, tag = 'scoped memory for tpu_custom_call.1']
  %s0 = inlined_call_operand.hbm [shape: f32[2,8,256], index: 0, kind: input, shape index: {}]
  %s1 = inlined_call_operand.vmem [shape: f32[8,1], index: 1, kind: input, shape index: {}]
  %s2 = inlined_call_operand.<no memory space> [shape: f32[1,1], index: 2, kind: input, shape index: {}]
  %s3 = inlined_call_operand.hbm [shape: f32[2,1,256], index: 3, kind: output, shape index: {}]
  %s4 = sld [smem:[#allocation0]]
  $region49: #{tpu_custom_call.1} parent=0
    _
  %s6 = ssub.s32 1, %s4
  %s7 = scalar_select 0, %s6, %s4
  %8 = sst [smem:[#allocation2]] %s2
  $region1: #{tpu_custom_call.1} parent=0
    #allocation3 [shape = 'u8[16384]{0}', space=vmem, size = 0x4000, scoped, tag = 'input window, operand 0']
    #allocation4 [shape = 's32[2]{0}', space=sflag, size = 0x8, scoped, tag = 'scoped memory for tpu_custom_call.1']
    #allocation5 [shape = 's32[2]{0}', space=sflag, size = 0x8, scoped, tag = 'scoped memory for tpu_custom_call.1']
    #allocation6 [shape = 'u8[2048]{0}', space=vmem, size = 0x800, scoped, tag = 'output window, operand 0']
    %9 = vsyncpa [#allocation4], 0
    %s10 = scalar_lea.sflag [#allocation4], 1
    %11 = vsyncpa %s10, 0
    %12 = vsyncpa [#allocation5], 0
    %s13 = scalar_lea.sflag [#allocation5], 1
    %14 = vsyncpa %s13, 0
    loop: start=0, step=1, limit=4
    $region2: #{tpu_custom_call.1} parent=1 // loop_pre_header
      _
    $region3: #{tpu_custom_call.1} parent=1 // loop_header
      %s16 = sphi 0, %s20
      %p17 = scmp.ge.s32.totalorder %s16, 4
      %s23 = sphi 0, %s35
      %s24 = sphi 0, %s31
      %s25 = sphi 0, %s23
      %s26 = sphi 0, %s24
      %s27 = sphi 0, %s25
      %s28 = sphi 0, %s26
      %s40 = sphi 0, %s42
      %s43 = sphi 0, %s40
      %s44 = sphi 0, %s43
      %s60 = sphi 0, %s44
      %s64 = sphi 0, %s64
      %s66 = sphi 0, %s64
      %s67 = sphi 0, %s66
      %s81 = sphi 0, %s67
      %s85 = sphi 0, %s85
      %s87 = sphi 0, %s85
      %s88 = sphi 0, %s87
      %s102 = sphi 0, %s88
      %s110 = sphi 0, %s112
      %s113 = sphi 0, %s110
      %s114 = sphi 0, %s113
      %s130 = sphi 0, %s114
    $region4: #{tpu_custom_call.1} parent=1 // loop_header_branch
      %19 = sbr.rel (%p17) target = $region8
    $region5: #{tpu_custom_call.1} parent=1 // loop_body
      %s21 = ssub.s32 %s16, 1
      %s22 = ssub.s32 %s16, 2
      %s29 = sadd.s32 1, %s24
      %p30 = scmp.ge.s32.totalorder %s29, 1
      %s31 = scalar_select %p30, 0, %s29
      %s32 = sadd.s32 1, %s23
      %s33 = scalar_select %p30, %s32, %s23
      %p34 = scmp.ge.s32.totalorder %s33, 2
      %s35 = scalar_select %p34, 0, %s33
      %s36 = ssub.s32 %s23, %s35
      %s37 = ssub.s32 %s24, %s31
      %s38 = sor.u32 %s36, %s37
      %p39 = scmp.eq.s32.totalorder %s38, 0
      %s41 = sadd.s32 %s40, 1
      %s42 = scalar_select %p39, %s40, %s41
      %p45 = pneg %p39
      %p46 = scmp.eq.s32.totalorder %s16, 1
      %p47 = por %p45, %p46
      %p48 = scmp.ne.s32.totalorder %s40, %s43
      %p49 = scmp.eq.s32.totalorder %s16, 0
      %p50 = por %p48, %p49
      %p51 = scmp.ne.s32.totalorder %s40, %s43
      %p52 = scmp.eq.s32.totalorder %s21, 1
      %p53 = por %p51, %p52
      %p54 = scmp.ne.s32.totalorder %s43, %s44
      %p55 = scmp.eq.s32.totalorder %s21, 0
      %p56 = por %p54, %p55
      %p57 = scmp.ne.s32.totalorder %s43, %s44
      %p58 = scmp.eq.s32.totalorder %s22, 1
      %p59 = por %p57, %p58
      %p61 = scmp.ne.s32.totalorder %s44, %s60
      %p62 = scmp.eq.s32.totalorder %s22, 0
      %p63 = por %p61, %p62
      %s65 = sadd.s32 %s64, 1
      %p68 = scmp.eq.s32.totalorder %s16, 1
      %p69 = scmp.ne.s32.totalorder %s64, %s66
      %p70 = scmp.eq.s32.totalorder %s16, 0
      %p71 = por %p69, %p70
      %p72 = scmp.ne.s32.totalorder %s64, %s66
      %p73 = scmp.eq.s32.totalorder %s21, 1
      %p74 = por %p72, %p73
      %p75 = scmp.ne.s32.totalorder %s66, %s67
      %p76 = scmp.eq.s32.totalorder %s21, 0
      %p77 = por %p75, %p76
      %p78 = scmp.ne.s32.totalorder %s66, %s67
      %p79 = scmp.eq.s32.totalorder %s22, 1
      %p80 = por %p78, %p79
      %p82 = scmp.ne.s32.totalorder %s67, %s81
      %p83 = scmp.eq.s32.totalorder %s22, 0
      %p84 = por %p82, %p83
      %s86 = sadd.s32 %s85, 1
      %p89 = scmp.eq.s32.totalorder %s16, 1
      %p90 = scmp.ne.s32.totalorder %s85, %s87
      %p91 = scmp.eq.s32.totalorder %s16, 0
      %p92 = por %p90, %p91
      %p93 = scmp.ne.s32.totalorder %s85, %s87
      %p94 = scmp.eq.s32.totalorder %s21, 1
      %p95 = por %p93, %p94
      %p96 = scmp.ne.s32.totalorder %s87, %s88
      %p97 = scmp.eq.s32.totalorder %s21, 0
      %p98 = por %p96, %p97
      %p99 = scmp.ne.s32.totalorder %s87, %s88
      %p100 = scmp.eq.s32.totalorder %s22, 1
      %p101 = por %p99, %p100
      %p103 = scmp.ne.s32.totalorder %s88, %s102
      %p104 = scmp.eq.s32.totalorder %s22, 0
      %p105 = por %p103, %p104
      %s106 = ssub.s32 %s23, %s35
      %s107 = ssub.s32 %s24, %s31
      %s108 = sor.u32 %s106, %s107
      %p109 = scmp.eq.s32.totalorder %s108, 0
      %s111 = sadd.s32 %s110, 1
      %s112 = scalar_select %p109, %s110, %s111
      %p115 = pneg %p109
      %p116 = scmp.eq.s32.totalorder %s16, 1
      %p117 = por %p115, %p116
      %p118 = scmp.ne.s32.totalorder %s110, %s113
      %p119 = scmp.eq.s32.totalorder %s16, 0
      %p120 = por %p118, %p119
      %p121 = scmp.ne.s32.totalorder %s110, %s113
      %p122 = scmp.eq.s32.totalorder %s21, 1
      %p123 = por %p121, %p122
      %p124 = scmp.ne.s32.totalorder %s113, %s114
      %p125 = scmp.eq.s32.totalorder %s21, 0
      %p126 = por %p124, %p125
      %p127 = scmp.ne.s32.totalorder %s113, %s114
      %p128 = scmp.eq.s32.totalorder %s22, 1
      %p129 = por %p127, %p128
      %p131 = scmp.ne.s32.totalorder %s114, %s130
      %p132 = scmp.eq.s32.totalorder %s22, 0
      %p133 = por %p131, %p132
      %p134 = scmp.le.s32.totalorder 1, %s16
      %p135 = scmp.lt.s32.totalorder %s16, 3
      %p136 = pnand %p134, %p135
      %p137 = pneg %p136
      // Predicated region
      $region9: #{tpu_custom_call.1} parent=5 // pred_check
        _
      $region10: #{tpu_custom_call.1} parent=5 // pred_check_branch
        %139 = sbr.rel (%p136) target = $region12
      $region11: #{tpu_custom_call.1} parent=5 // pred_region
        %s140 = ssub.s32 %s16, 1
        // Predicated region
        $region13: #{tpu_custom_call.1} parent=11 // pred_check
          %p141 = pneg %p77
        $region14: #{tpu_custom_call.1} parent=11 // pred_check_branch
          %143 = sbr.rel (%p141) target = $region16
        $region15: #{tpu_custom_call.1} parent=11 // pred_region
          _
        $region16: #{tpu_custom_call.1} parent=11 // pred_fallthru
          _
        // Predicated region
        $region17: #{tpu_custom_call.1} parent=11 // pred_check
          %p144 = pneg %p98
        $region18: #{tpu_custom_call.1} parent=11 // pred_check_branch
          %146 = sbr.rel (%p144) target = $region20
        $region19: #{tpu_custom_call.1} parent=11 // pred_region
          _
        $region20: #{tpu_custom_call.1} parent=11 // pred_fallthru
          _
      $region12: #{tpu_custom_call.1} parent=5 // pred_fallthru
        _
      %p147 = scmp.lt.s32.totalorder %s16, 2
      // Predicated region
      $region21: #{tpu_custom_call.1} parent=5 // pred_check
        %p148 = pneg %p147
      $region22: #{tpu_custom_call.1} parent=5 // pred_check_branch
        %150 = sbr.rel (%p148) target = $region24
      $region23: #{tpu_custom_call.1} parent=5 // pred_region
        // Predicated region
        $region25: #{tpu_custom_call.1} parent=23 // pred_check
          %p151 = pneg %p50
        $region26: #{tpu_custom_call.1} parent=23 // pred_check_branch
          %153 = sbr.rel (%p151) target = $region28
        $region27: #{tpu_custom_call.1} parent=23 // pred_region
          %s154 = sand.u32 %s40, 1
          %s155 = scalar_lea.sflag [#allocation4], %s154
          %s156 = sand.u32 %s40, 1
          %s157 = smul.addr %s156, 16
          %s158 = scalar_lea.vmem [#allocation3], %s157
          %s159 = smul.u32 2, %s24
          %s161 = ssub.s32 256, 256
          %162 = vsyncadd %s155, %s161
          %s163 = smul.addr %s23, 2
          %s164 = sadd.s32 %s159, %s163
          %s165 = smul.addr %s164, 128
          %s166 = scalar_lea.hbm %s0, %s165
          %s168 = sshll.u32 %s158, 4
          %s169 = int_to_ptr.vmem [resolvable:$true] %s168
          %171 = dma.hbm_to_vmem [thread:$0]  %s166, 256, %s169, %s155
        $region28: #{tpu_custom_call.1} parent=23 // pred_fallthru
          _
      $region24: #{tpu_custom_call.1} parent=5 // pred_fallthru
        _
      %p172 = scmp.le.s32.totalorder 1, %s16
      %p173 = scmp.lt.s32.totalorder %s16, 3
      %p174 = pnand %p172, %p173
      %p175 = pneg %p174
      // Predicated region
      $region29: #{tpu_custom_call.1} parent=5 // pred_check
        _
      $region30: #{tpu_custom_call.1} parent=5 // pred_check_branch
        %177 = sbr.rel (%p174) target = $region32
      $region31: #{tpu_custom_call.1} parent=5 // pred_region
        %s178 = ssub.s32 %s16, 1
        %s179 = sand.u32 %s43, 1
        %s180 = scalar_lea.sflag [#allocation4], %s179
        %s181 = sand.u32 %s43, 1
        %s182 = smul.addr %s181, 16
        %s183 = scalar_lea.vmem [#allocation3], %s182
        // Predicated region
        $region33: #{tpu_custom_call.1} parent=31 // pred_check
          %p184 = pneg %p56
        $region34: #{tpu_custom_call.1} parent=31 // pred_check_branch
          %186 = sbr.rel (%p184) target = $region36
        $region35: #{tpu_custom_call.1} parent=31 // pred_region
          %187 = dma.done %s180, 256
        $region36: #{tpu_custom_call.1} parent=31 // pred_fallthru
          _
        %s188 = sand.u32 %s43, 1
        %s189 = scalar_lea.sflag [#allocation4], %s188
        %s190 = sand.u32 %s43, 1
        %s191 = smul.addr %s190, 16
        %s192 = scalar_lea.vmem [#allocation3], %s191
        %p193 = pneg %p56
        %p194 = pneg %p53
        %p195 = pneg %p77
        %p196 = pneg %p74
        %p197 = pneg %p98
        %p198 = pneg %p95
        %p199 = pneg %p126
        %p200 = pneg %p123
        %s201 = sand.u32 %s113, 1
        %s202 = scalar_lea.sflag [#allocation5], %s201
        %s203 = sand.u32 %s113, 1
        %s204 = smul.addr %s203, 2
        %s205 = scalar_lea.vmem [#allocation6], %s204
        %s206 = smul.u32 2, %s26
        %s207 = smul.u32 2, %s26
        %v208 = vld [vmem:[%s183] sm:$0xff]
        %v209 = vld [vmem:[%s183 + $0x8] sm:$0xff]
        %v210 = vld [vmem:[%s1] sm:$0xff]
        %212 = vset.pattern.permute.xlu0 0
        %213 = vperm.xlu0 %212, %v210
        %v214 = vpop.permute.xlu0 %213
        %v216 = vmul.f32 %v208, %v214
        %v217 = vmul.f32 %v209, %v214
        %v218 = vrot.slane %v216, 4
        %v219 = vadd.f32 %v216, %v218
        %v220 = vrot.slane %v219, 2
        %v221 = vadd.f32 %v219, %v220
        %v222 = vrot.slane %v221, 1
        %v223 = vadd.f32 %v221, %v222
        %v224 = vrot.slane %v217, 4
        %v225 = vadd.f32 %v217, %v224
        %v226 = vrot.slane %v225, 2
        %v227 = vadd.f32 %v225, %v226
        %v228 = vrot.slane %v227, 1
        %v229 = vadd.f32 %v227, %v228
        %s230 = sld [smem:[#allocation2]]
        %v231 = vstv %s230
        %v232 = vadd.f32 %v223, %v231
        %v233 = vadd.f32 %v229, %v231
        %v236 = vcombine.low %v232, %v233
        %v238 = vunpack.c.l.s4 1966171168
        %v239 = vunpack.c.0.s8 %v238
        %v240 = vlaneseq
        %v241 = vshrl.u32 %v240, 7
        %v242 = vsub.s32 %v239, %v241
        %v243 = vrot.slane %v236, %v242
        %v245 = vunpack.c.l.s4 1966171168
        %v246 = vunpack.c.0.s8 %v245
        %v247 = vlaneseq
        %v248 = vshrl.u32 %v247, 7
        %v249 = vsub.s32 %v246, %v248
        %v250 = vrot.slane %v243, %v249
        %v252 = vlaneseq
        %vm253 = vcmp.ge.s32.totalorder %v252, 0
        %vm254 = vcmp.lt.s32.totalorder %v252, 256
        %vm255 = vmand %vm253, %vm254
        %256 = vst.msk [vmem:[%s205] sm:$0x3] %vm255, %v250
        %s257 = sand.u32 %s113, 1
        %s258 = scalar_lea.sflag [#allocation5], %s257
        %s259 = sand.u32 %s113, 1
        %s260 = smul.addr %s259, 2
        %s261 = scalar_lea.vmem [#allocation6], %s260
        // Predicated region
        $region37: #{tpu_custom_call.1} parent=31 // pred_check
          %p262 = pneg %p123
        $region38: #{tpu_custom_call.1} parent=31 // pred_check_branch
          %264 = sbr.rel (%p262) target = $region40
        $region39: #{tpu_custom_call.1} parent=31 // pred_region
          %s265 = smul.u32 2, %s26
          %s267 = ssub.s32 32, 32
          %268 = vsyncadd %s258, %s267
          %s269 = smul.addr %s25, 2
          %s270 = sadd.s32 %s265, %s269
          %s271 = smul.addr %s270, 16
          %s272 = scalar_lea.hbm %s3, %s271
          %s274 = sshll.u32 %s261, 4
          %s275 = int_to_ptr.vmem [resolvable:$true] %s274
          %277 = dma.vmem_to_hbm [thread:$0]  %s275, 32, %s272, %s258
        $region40: #{tpu_custom_call.1} parent=31 // pred_fallthru
          _
      $region32: #{tpu_custom_call.1} parent=5 // pred_fallthru
        _
      %p278 = scmp.le.s32.totalorder 2, %s16
      // Predicated region
      $region41: #{tpu_custom_call.1} parent=5 // pred_check
        %p279 = pneg %p278
      $region42: #{tpu_custom_call.1} parent=5 // pred_check_branch
        %281 = sbr.rel (%p279) target = $region44
      $region43: #{tpu_custom_call.1} parent=5 // pred_region
        %s282 = ssub.s32 %s16, 2
        // Predicated region
        $region45: #{tpu_custom_call.1} parent=43 // pred_check
          %p283 = pneg %p129
        $region46: #{tpu_custom_call.1} parent=43 // pred_check_branch
          %285 = sbr.rel (%p283) target = $region48
        $region47: #{tpu_custom_call.1} parent=43 // pred_region
          %s286 = sand.u32 %s114, 1
          %s287 = scalar_lea.sflag [#allocation5], %s286
          %s288 = sand.u32 %s114, 1
          %s289 = smul.addr %s288, 2
          %s290 = scalar_lea.vmem [#allocation6], %s289
          %291 = dma.done %s287, 32
        $region48: #{tpu_custom_call.1} parent=43 // pred_fallthru
          _
      $region44: #{tpu_custom_call.1} parent=5 // pred_fallthru
        _
    $region6: #{tpu_custom_call.1} parent=1 // loop_footer
      %s20 = sadd.s32 1, %s16
    $region7: #{tpu_custom_call.1} parent=1 // loop_footer_branch
      %15 = sbr.rel target = $region3
    $region8: #{tpu_custom_call.1} parent=1 // loop_exit
      _
    %292 = vsyncpa [#allocation4], 1
    %s293 = scalar_lea.sflag [#allocation4], 1
    %294 = vsyncpa %s293, 1
    %295 = vsyncpa [#allocation5], 1
    %s296 = scalar_lea.sflag [#allocation5], 1
    %297 = vsyncpa %s296, 1

</llo_original>
